<compile_context>
chip_gen: v7x
topology: tpu7x:2x2x1
jax: 0.10.0
libtpu: 0.0.40
codegen_flags: <defaults>
</compile_context>

<pallas_src>
import functools
import math
from typing import NamedTuple, Optional

import jax
import jax.numpy as jnp
from jax.experimental import pallas as pl
from jax.experimental.pallas import tpu as pltpu


# --------------------------- helpers -----------------------------------------

def _round_up(x, m):
    return (x + m - 1) // m * m


@functools.lru_cache(maxsize=None)
def _vmem_budget_bytes():
    """Generation-aware VMEM budget (~75% of per-core VMEM, capped at 100 MiB)."""
    cap = 64 * 1024 * 1024
    try:
        cap = int(getattr(pltpu.get_tpu_info(), "vmem_capacity_bytes", cap))
    except Exception:
        pass
    return max(32 * 1024 * 1024, min(cap * 3 // 4, 100 * 1024 * 1024))


# --------------------------- Pallas kernels ----------------------------------

def _make_mm_kernel(relu, has_res):
    """Full-K matmul tile: bf16 x bf16 -> f32, fused bias / residual / ReLU."""
    def kernel(x_ref, w_ref, b_ref, *rest):
        if has_res:
            r_ref, o_ref = rest
        else:
            (o_ref,) = rest
        out = jnp.dot(x_ref[...], w_ref[...], preferred_element_type=jnp.float32)
        out = out + b_ref[...]
        if has_res:
            out = out + r_ref[...].astype(jnp.float32)
        if relu:
            out = jnp.maximum(out, 0.0)
        o_ref[...] = out.astype(o_ref.dtype)
    return kernel


def _make_conv3x3_kernel(taps, relu):
    """Implicit-im2col 3x3 stride-1 conv: 9 shifted matmuls, f32 accumulation."""
    def kernel(x_ref, w_ref, b_ref, o_ref):
        # x_ref: (Mrows, C) bf16 flattened padded image
        # w_ref: (9, C, tn) bf16 ; b_ref: (1, tn) f32 ; o_ref: (Mo, tn) bf16
        mo = o_ref.shape[0]
        acc = jnp.zeros(o_ref.shape, jnp.float32)
        for t, off in enumerate(taps):
            acc = acc + jnp.dot(x_ref[off:off + mo, :], w_ref[t],
                                preferred_element_type=jnp.float32)
        out = acc + b_ref[...]
        if relu:
            out = jnp.maximum(out, 0.0)
        o_ref[...] = out.astype(o_ref.dtype)
    return kernel


# --------------------------- fused tiled matmul ------------------------------

def _matmul_fused(x, w, b, n_out, residual=None, relu=False):
    """act((x @ w) + b [+ residual]) -> bf16.

    x: (M, K) bf16 ; w: (Kp, Np) bf16 pre-padded ; b: (1, Np) f32.
    """
    M, K = x.shape
    Kp, Np = w.shape
    budget = _vmem_budget_bytes()
    Mp = _round_up(M, 128)
    tm = 256 if Mp % 256 == 0 else 128

    has_res = residual is not None

    def _vmem_use(tn_):
        x_t = tm * Kp * 2
        w_t = Kp * tn_ * 2
        o_t = tm * tn_ * 2
        r_t = tm * tn_ * 2 if has_res else 0
        b_t = tn_ * 4
        return 2 * (x_t + w_t + o_t + r_t + b_t) + tm * tn_ * 4

    tn = Np
    while tn > 128 and _vmem_use(tn) > budget // 2:
        tn //= 2
    # keep >= 2 parallel tiles so both v7x TensorCores get work
    if (Mp // tm) == 1 and (Np // tn) == 1 and Np >= 256:
        tn = Np // 2

    if (M, K) != (Mp, Kp):
        x = jnp.pad(x, ((0, Mp - M), (0, Kp - K)))

    in_specs = [
        pl.BlockSpec((tm, Kp), lambda i, j: (i, 0)),
        pl.BlockSpec((Kp, tn), lambda i, j: (0, j)),
        pl.BlockSpec((1, tn), lambda i, j: (0, j)),
    ]
    args = [x, w, b]
    if has_res:
        if residual.shape != (Mp, Np):
            residual = jnp.pad(residual, ((0, Mp - residual.shape[0]),
                                          (0, Np - residual.shape[1])))
        in_specs.append(pl.BlockSpec((tm, tn), lambda i, j: (i, j)))
        args.append(residual)

    flops = 2 * Mp * Np * Kp
    bytes_acc = (Mp * Kp * 2 + Kp * Np * 2 + Mp * Np * 2 + Np * 4
                 + (Mp * Np * 2 if has_res else 0))

    out = pl.pallas_call(
        _make_mm_kernel(relu, has_res),
        out_shape=jax.ShapeDtypeStruct((Mp, Np), jnp.bfloat16),
        grid_spec=pltpu.PrefetchScalarGridSpec(
            num_scalar_prefetch=0,
            grid=(Mp // tm, Np // tn),
            in_specs=in_specs,
            out_specs=pl.BlockSpec((tm, tn), lambda i, j: (i, j)),
        ),
        compiler_params=pltpu.CompilerParams(
            dimension_semantics=("parallel", "parallel"),
            vmem_limit_bytes=budget),
        cost_estimate=pl.CostEstimate(flops=int(flops), transcendentals=0,
                                      bytes_accessed=int(bytes_acc)),
    )(*args)

    if Mp != M or Np != n_out:
        out = out[:M, :n_out]
    return out


# --------------------------- fused 3x3 stride-1 conv -------------------------

def _conv3x3_s1(x, w9, b, cout, relu):
    """3x3 / stride 1 / pad 1 conv without HBM im2col.  Returns None if the
    per-image flat block would not fit the VMEM budget (caller falls back)."""
    N, H, W, C = x.shape
    Wp = W + 2
    Mrows = (H + 3) * Wp            # pad: 1 top, 2 bottom, 1 left, 1 right
    Mo = H * Wp                     # flat rows we compute (cols >= W are garbage)
    budget = _vmem_budget_bytes()

    def _vmem_use(tn_):
        return (2 * (Mrows * C * 2 + 9 * C * tn_ * 2 + Mo * tn_ * 2 + tn_ * 4)
                + Mo * tn_ * 4)

    tn = cout
    while tn > 128 and _vmem_use(tn) > budget // 2:
        tn //= 2
    if _vmem_use(tn) > budget // 2:
        return None
    if N == 1 and cout // tn < 2 and cout >= 256:   # feed both v7x TCs
        tn = cout // 2

    xp = jnp.pad(x, ((0, 0), (1, 2), (1, 1), (0, 0)))
    xflat = xp.reshape(N, Mrows, C)
    taps = tuple(di * Wp + dj for di in range(3) for dj in range(3))

    flops = 2 * N * Mo * 9 * C * cout
    bytes_acc = N * Mrows * C * 2 + 9 * C * cout * 2 + N * Mo * cout * 2 + cout * 4

    out = pl.pallas_call(
        _make_conv3x3_kernel(taps, relu),
        out_shape=jax.ShapeDtypeStruct((N, Mo, cout), jnp.bfloat16),
        grid_spec=pltpu.PrefetchScalarGridSpec(
            num_scalar_prefetch=0,
            grid=(N, cout // tn),
            in_specs=[
                pl.BlockSpec((None, Mrows, C), lambda n, j: (n, 0, 0)),
                pl.BlockSpec((9, C, tn), lambda n, j: (0, 0, j)),
                pl.BlockSpec((1, tn), lambda n, j: (0, j)),
            ],
            out_specs=pl.BlockSpec((None, Mo, tn), lambda n, j: (n, 0, j)),
        ),
        compiler_params=pltpu.CompilerParams(
            dimension_semantics=("parallel", "parallel"),
            vmem_limit_bytes=budget),
        cost_estimate=pl.CostEstimate(flops=int(flops), transcendentals=0,
                                      bytes_accessed=int(bytes_acc)),
    )(xflat, w9, b)

    return out.reshape(N, H, Wp, cout)[:, :, :W, :]


# --------------------------- conv / pool wrappers ----------------------------

def _im2col(x, kh, kw, stride, pad):
    """x: (N,H,W,C) bf16 -> ((N*Ho*Wo, kh*kw*C), Ho, Wo)."""
    N, H, W, C = x.shape
    if kh == 1 and kw == 1 and pad == 0:
        Ho = (H - 1) // stride + 1
        Wo = (W - 1) // stride + 1
        if stride != 1:
            x = x[:, ::stride, ::stride, :]
        return x.reshape(N * Ho * Wo, C), Ho, Wo
    if pad > 0:
        x = jnp.pad(x, ((0, 0), (pad, pad), (pad, pad), (0, 0)))
    Ho = (H + 2 * pad - kh) // stride + 1
    Wo = (W + 2 * pad - kw) // stride + 1
    cols = [x[:, i:i + stride * Ho:stride, j:j + stride * Wo:stride, :]
            for i in range(kh) for j in range(kw)]
    patches = jnp.concatenate(cols, axis=-1)
    return patches.reshape(N * Ho * Wo, kh * kw * C), Ho, Wo


class ConvMeta(NamedTuple):
    kh: int
    kw: int
    cin: int
    cout: int
    stride: int
    pad: int


class BlockMeta(NamedTuple):
    stride: int
    c1: ConvMeta
    c2: ConvMeta
    c3: ConvMeta
    down: Optional[ConvMeta]


def conv2d(x, p, meta, relu=False, residual=None):
    """NHWC bf16 conv; optional fused residual-add + ReLU (used on the 3rd 1x1)."""
    N = x.shape[0]
    if (meta.kh == 3 and meta.kw == 3 and meta.stride == 1 and meta.pad == 1
            and residual is None):
        out = _conv3x3_s1(x, p["w"], p["b"], meta.cout, relu)
        if out is not None:
            return out
        # TODO(synk): very large images fall back to HBM im2col (convert weight layout).
        K = 9 * meta.cin
        Kp, Np = _round_up(K, 128), _round_up(meta.cout, 128)
        p = {"w": jnp.pad(p["w"].reshape(K, meta.cout),
                          ((0, Kp - K), (0, Np - meta.cout))),
             "b": jnp.pad(p["b"], ((0, 0), (0, Np - meta.cout)))}

    patches, Ho, Wo = _im2col(x, meta.kh, meta.kw, meta.stride, meta.pad)
    res2d = residual.reshape(-1, meta.cout) if residual is not None else None
    out = _matmul_fused(patches, p["w"], p["b"], meta.cout,
                        residual=res2d, relu=relu)
    return out.reshape(N, Ho, Wo, meta.cout)


def maxpool2d(x, k=3, stride=2, pad=1):
    # TODO(synk): left to XLA fusion (pairwise max tree) per perf review; the
    # stride-2 overlapping windows cannot be expressed by a BlockSpec without
    # materializing a k*k stack in HBM.
    N, H, W, C = x.shape
    Ho = (H + 2 * pad - k) // stride + 1
    Wo = (W + 2 * pad - k) // stride + 1
    xp = jnp.pad(x, ((0, 0), (pad, pad), (pad, pad), (0, 0)),
                 constant_values=-jnp.inf)
    out = None
    for i in range(k):
        for j in range(k):
            win = xp[:, i:i + stride * Ho:stride, j:j + stride * Wo:stride, :]
            out = win if out is None else jnp.maximum(out, win)
    return out


# --------------------------- architecture (static) ---------------------------

def _resnet101_arch():
    layers_cfg = (3, 4, 23, 3)
    stem = ConvMeta(7, 7, 3, 64, 2, 3)
    inplanes = 64
    layers = []
    for li, nb in enumerate(layers_cfg):
        planes = 64 * (2 ** li)
        layer_stride = 1 if li == 0 else 2
        blocks = []
        for bi in range(nb):
            s = layer_stride if bi == 0 else 1
            c1 = ConvMeta(1, 1, inplanes, planes, 1, 0)
            c2 = ConvMeta(3, 3, planes, planes, s, 1)
            c3 = ConvMeta(1, 1, planes, planes * 4, 1, 0)
            down = None
            if bi == 0 and (s != 1 or inplanes != planes * 4):
                down = ConvMeta(1, 1, inplanes, planes * 4, s, 0)
            blocks.append(BlockMeta(s, c1, c2, c3, down))
            inplanes = planes * 4
        layers.append(tuple(blocks))
    return stem, tuple(layers)


_ARCH = _resnet101_arch()


# --------------------------- parameters (deterministic) ----------------------

def _init_conv(key, m):
    # matches ResNet.init_weights: normal(0, sqrt(2 / (kh*kw*cout))), bias 0.
    std = math.sqrt(2.0 / (m.kh * m.kw * m.cout))
    w = std * jax.random.normal(key, (m.kh, m.kw, m.cin, m.cout), dtype=jnp.float32)
    if m.kh == 3 and m.kw == 3 and m.stride == 1:
        # fused implicit-im2col layout: (9, Cin, Cout) bf16
        wk = w.reshape(9, m.cin, m.cout).astype(jnp.bfloat16)
        b = jnp.zeros((1, m.cout), jnp.float32)
    else:
        # matmul layout: (Kp, Np) bf16, zero-padded to MXU alignment
        K = m.kh * m.kw * m.cin
        Kp, Np = _round_up(K, 128), _round_up(m.cout, 128)
        wk = jnp.pad(w.reshape(K, m.cout),
                     ((0, Kp - K), (0, Np - m.cout))).astype(jnp.bfloat16)
        b = jnp.zeros((1, Np), jnp.float32)
    return {"w": wk, "b": b}


def build_resnet101_params(key):
    stem_meta, layers_meta = _ARCH
    n_convs = 1 + sum(3 + (1 if blk.down is not None else 0)
                      for layer in layers_meta for blk in layer)
    keys = iter(jax.random.split(key, n_convs))
    params = {"stem": _init_conv(next(keys), stem_meta)}
    layers = []
    for layer in layers_meta:
        blocks = []
        for blk in layer:
            p = {"c1": _init_conv(next(keys), blk.c1),
                 "c2": _init_conv(next(keys), blk.c2),
                 "c3": _init_conv(next(keys), blk.c3)}
            if blk.down is not None:
                p["down"] = _init_conv(next(keys), blk.down)
            blocks.append(p)
        layers.append(blocks)
    params["layers"] = layers
    return params


# --------------------------- forward pass ------------------------------------

def _stem_apply(meta, p, x_nchw):
    x = jnp.transpose(x_nchw, (0, 2, 3, 1)).astype(jnp.bfloat16)   # NCHW -> NHWC
    x = conv2d(x, p, meta, relu=True)
    return maxpool2d(x, 3, 2, 1)


def _bottleneck_apply(meta, p, x):
    out = conv2d(x, p["c1"], meta.c1, relu=True)
    out = conv2d(out, p["c2"], meta.c2, relu=True)
    if meta.down is not None:
        residual = conv2d(x, p["down"], meta.down, relu=False)
    else:
        residual = x
    # last 1x1 conv: bias + residual add + ReLU fused into the matmul epilogue
    return conv2d(out, p["c3"], meta.c3, relu=True, residual=residual)


@functools.lru_cache(maxsize=None)
def _jit_stem(meta):
    return jax.jit(functools.partial(_stem_apply, meta))


@functools.lru_cache(maxsize=None)
def _jit_block(meta):
    # one compiled program per unique block config (layer3's 22 identical
    # blocks share a single compile); all conv glue fuses with the pallas_calls.
    return jax.jit(functools.partial(_bottleneck_apply, meta))


def resnet101_forward(params, x_nchw):
    stem_meta, layers_meta = _ARCH
    x = _jit_stem(stem_meta)(params["stem"], x_nchw)
    res = []
    for li, (blocks_meta, blocks_p) in enumerate(zip(layers_meta, params["layers"])):
        for bm, bp in zip(blocks_meta, blocks_p):
            x = _jit_block(bm)(bp, x)
        # features index = li + 2 ; out_indices = [3, 4, 5]
        if (li + 2) in (3, 4, 5):
            res.append(jnp.transpose(x, (0, 3, 1, 2)).astype(jnp.float32))
    return res


# --------------------------- demo --------------------------------------------

if __name__ == "__main__":
    key = jax.random.PRNGKey(0)
    pkey, xkey = jax.random.split(key)
    params = build_resnet101_params(pkey)

    # small input: batch=2, 3 channels (first conv requires Cin=3), 32x32 spatial
    x = jax.random.normal(xkey, (2, 3, 32, 32), dtype=jnp.float32)

    outs = resnet101_forward(params, x)
    outs = [jax.block_until_ready(o) for o in outs]

    expected = [(2, 512, 4, 4), (2, 1024, 2, 2), (2, 2048, 1, 1)]
    got = [tuple(o.shape) for o in outs]
    assert got == expected, f"unexpected output shapes: {got}"
    assert all(bool(jnp.all(jnp.isfinite(o))) for o in outs)
    print("KERNEL_OK")
</pallas_src>

<mosaic_0001>
module attributes {stable_mosaic.version = 11 : i64} {
  func.func @kernel(%arg0: i32, %arg1: i32, %arg2: memref<256x256xbf16, #tpu.memory_space<vmem>>, %arg3: memref<256x128xbf16, #tpu.memory_space<vmem>>, %arg4: memref<1x128xf32, #tpu.memory_space<vmem>>, %arg5: memref<256x128xbf16, #tpu.memory_space<vmem>>) attributes {dimension_semantics = [#tpu.dimension_semantics<parallel>, #tpu.dimension_semantics<parallel>], iteration_bounds = array<i64: 2, 1>, scalar_prefetch = 0 : i64, scratch_operands = 0 : i64, tpu.core_type = #tpu.core_type<tc>, window_params = [{transform_indices = @transform_0, window_bounds = array<i64: 256, 256>}, {transform_indices = @transform_1, window_bounds = array<i64: 256, 128>}, {transform_indices = @transform_2, window_bounds = array<i64: 1, 128>}, {transform_indices = @transform_3, window_bounds = array<i64: 256, 128>}]} {
    %c0 = arith.constant 0 : index
    %c0_0 = arith.constant 0 : index
    %0 = vector.load %arg2[%c0, %c0_0] : memref<256x256xbf16, #tpu.memory_space<vmem>>, vector<256x256xbf16>
    %c0_1 = arith.constant 0 : index
    %c0_2 = arith.constant 0 : index
    %1 = vector.load %arg3[%c0_1, %c0_2] : memref<256x128xbf16, #tpu.memory_space<vmem>>, vector<256x128xbf16>
    %cst = arith.constant dense<0.000000e+00> : vector<256x128xf32>
    %2 = tpu.matmul %0, %1, %cst {dimension_numbers = #tpu.dot_dimension_numbers<[1], [0], [0], [1], [0, 0, 1, 1], [], []>} : vector<256x256xbf16>, vector<256x128xbf16>, vector<256x128xf32> -> vector<256x128xf32>
    %c0_3 = arith.constant 0 : index
    %c0_4 = arith.constant 0 : index
    %3 = vector.load %arg4[%c0_3, %c0_4] : memref<1x128xf32, #tpu.memory_space<vmem>>, vector<1x128xf32>
    %4 = vector.broadcast %3 : vector<1x128xf32> to vector<256x128xf32>
    %5 = arith.addf %2, %4 : vector<256x128xf32>
    %cst_5 = arith.constant 0.000000e+00 : f32
    %6 = vector.broadcast %cst_5 : f32 to vector<256x128xf32>
    %7 = arith.maximumf %5, %6 : vector<256x128xf32>
    %8 = arith.truncf %7 : vector<256x128xf32> to vector<256x128xbf16>
    %c0_6 = arith.constant 0 : index
    %c0_7 = arith.constant 0 : index
    %9 = vector.load %arg5[%c0_6, %c0_7] : memref<256x128xbf16, #tpu.memory_space<vmem>>, vector<256x128xbf16>
    tpu.vector_store %arg5[%c0_6, %c0_7], %8 {strides = array<i32>} : memref<256x128xbf16, #tpu.memory_space<vmem>>, vector<256x128xbf16>,
    return
  }
  func.func @transform_0(%arg0: i32, %arg1: i32) -> (i32, i32) {
    %c0_i32 = arith.constant 0 : i32
    %c0_i32_0 = arith.constant 0 : i32
    return %arg0, %c0_i32 : i32, i32
  }
  func.func @transform_1(%arg0: i32, %arg1: i32) -> (i32, i32) {
    %c0_i32 = arith.constant 0 : i32
    %c0_i32_0 = arith.constant 0 : i32
    return %c0_i32, %arg1 : i32, i32
  }
  func.func @transform_2(%arg0: i32, %arg1: i32) -> (i32, i32) {
    %c0_i32 = arith.constant 0 : i32
    %c0_i32_0 = arith.constant 0 : i32
    return %c0_i32, %arg1 : i32, i32
  }
  func.func @transform_3(%arg0: i32, %arg1: i32) -> (i32, i32) {
    %c0_i32 = arith.constant 0 : i32
    return %arg0, %arg1 : i32, i32
  }
}

</mosaic_0001>

<llo_original>
// kernel: _stem_apply.1
$region0: #{_stem_apply.1}
  #allocation0 [shape = 'u32[]', space=smem, size = 0x4, offset = 0x4, fixed_abs, tag = 'smem constant byte address 0x4 - core index']
  #allocation1 [shape = 'u32[144,128]{1,0:T(1,128)}', space=vmem, size = 0x12000, scoped, tag = 'internal scratch']
  %s0 = inlined_call_operand.vmem [shape: bf16[512,256], index: 0, kind: input, shape index: {}]
  %s1 = inlined_call_operand.vmem [shape: bf16[256,128], index: 1, kind: input, shape index: {}]
  %s2 = inlined_call_operand.vmem [shape: f32[1,128], index: 2, kind: input, shape index: {}]
  %s3 = inlined_call_operand.vmem [shape: bf16[512,128], index: 3, kind: output, shape index: {}]
  %s4 = sld [smem:[#allocation0]]
  $region45: #{_stem_apply.1} parent=0
    _
  %s6 = ssub.s32 1, %s4
  %s7 = scalar_select 0, %s6, %s4
  loop: start=0, step=1, limit=4
  $region2: #{_stem_apply.1} parent=0 // loop_pre_header
    _
  $region3: #{_stem_apply.1} parent=0 // loop_header
    %s9 = sphi 0, %s13
    %p10 = scmp.ge.s32.totalorder %s9, 4
    %s16 = sphi 0, %s28
    %s17 = sphi 0, %s24
    %s18 = sphi 0, %s16
    %s19 = sphi 0, %s17
    %s20 = sphi 0, %s18
    %s21 = sphi 0, %s19
    %s31 = sphi 0, %s33
    %s34 = sphi 0, %s31
    %s35 = sphi 0, %s34
    %s51 = sphi 0, %s35
    %s57 = sphi 0, %s59
    %s60 = sphi 0, %s57
    %s61 = sphi 0, %s60
    %s77 = sphi 0, %s61
    %s83 = sphi 0, %s85
    %s86 = sphi 0, %s83
    %s87 = sphi 0, %s86
    %s103 = sphi 0, %s87
    %s111 = sphi 0, %s113
    %s114 = sphi 0, %s111
    %s115 = sphi 0, %s114
    %s131 = sphi 0, %s115
  $region4: #{_stem_apply.1} parent=0 // loop_header_branch
    %12 = sbr.rel (%p10) target = $region8
  $region5: #{_stem_apply.1} parent=0 // loop_body
    %s14 = ssub.s32 %s9, 1
    %s15 = ssub.s32 %s9, 2
    %s22 = sadd.s32 1, %s17
    %p23 = scmp.ge.s32.totalorder %s22, 1
    %s24 = scalar_select %p23, 0, %s22
    %s25 = sadd.s32 1, %s16
    %s26 = scalar_select %p23, %s25, %s16
    %p27 = scmp.ge.s32.totalorder %s26, 2
    %s28 = scalar_select %p27, 0, %s26
    %s29 = ssub.s32 %s16, %s28
    %p30 = scmp.eq.s32.totalorder %s29, 0
    %s32 = sadd.s32 %s31, 1
    %s33 = scalar_select %p30, %s31, %s32
    %p36 = pneg %p30
    %p37 = scmp.eq.s32.totalorder %s9, 1
    %p38 = por %p36, %p37
    %p39 = scmp.ne.s32.totalorder %s31, %s34
    %p40 = scmp.eq.s32.totalorder %s9, 0
    %p41 = por %p39, %p40
    %p42 = scmp.ne.s32.totalorder %s31, %s34
    %p43 = scmp.eq.s32.totalorder %s14, 1
    %p44 = por %p42, %p43
    %p45 = scmp.ne.s32.totalorder %s34, %s35
    %p46 = scmp.eq.s32.totalorder %s14, 0
    %p47 = por %p45, %p46
    %p48 = scmp.ne.s32.totalorder %s34, %s35
    %p49 = scmp.eq.s32.totalorder %s15, 1
    %p50 = por %p48, %p49
    %p52 = scmp.ne.s32.totalorder %s35, %s51
    %p53 = scmp.eq.s32.totalorder %s15, 0
    %p54 = por %p52, %p53
    %s55 = ssub.s32 %s17, %s24
    %p56 = scmp.eq.s32.totalorder %s55, 0
    %s58 = sadd.s32 %s57, 1
    %s59 = scalar_select %p56, %s57, %s58
    %p62 = pneg %p56
    %p63 = scmp.eq.s32.totalorder %s9, 1
    %p64 = por %p62, %p63
    %p65 = scmp.ne.s32.totalorder %s57, %s60
    %p66 = scmp.eq.s32.totalorder %s9, 0
    %p67 = por %p65, %p66
    %p68 = scmp.ne.s32.totalorder %s57, %s60
    %p69 = scmp.eq.s32.totalorder %s14, 1
    %p70 = por %p68, %p69
    %p71 = scmp.ne.s32.totalorder %s60, %s61
    %p72 = scmp.eq.s32.totalorder %s14, 0
    %p73 = por %p71, %p72
    %p74 = scmp.ne.s32.totalorder %s60, %s61
    %p75 = scmp.eq.s32.totalorder %s15, 1
    %p76 = por %p74, %p75
    %p78 = scmp.ne.s32.totalorder %s61, %s77
    %p79 = scmp.eq.s32.totalorder %s15, 0
    %p80 = por %p78, %p79
    %s81 = ssub.s32 %s17, %s24
    %p82 = scmp.eq.s32.totalorder %s81, 0
    %s84 = sadd.s32 %s83, 1
    %s85 = scalar_select %p82, %s83, %s84
    %p88 = pneg %p82
    %p89 = scmp.eq.s32.totalorder %s9, 1
    %p90 = por %p88, %p89
    %p91 = scmp.ne.s32.totalorder %s83, %s86
    %p92 = scmp.eq.s32.totalorder %s9, 0
    %p93 = por %p91, %p92
    %p94 = scmp.ne.s32.totalorder %s83, %s86
    %p95 = scmp.eq.s32.totalorder %s14, 1
    %p96 = por %p94, %p95
    %p97 = scmp.ne.s32.totalorder %s86, %s87
    %p98 = scmp.eq.s32.totalorder %s14, 0
    %p99 = por %p97, %p98
    %p100 = scmp.ne.s32.totalorder %s86, %s87
    %p101 = scmp.eq.s32.totalorder %s15, 1
    %p102 = por %p100, %p101
    %p104 = scmp.ne.s32.totalorder %s87, %s103
    %p105 = scmp.eq.s32.totalorder %s15, 0
    %p106 = por %p104, %p105
    %s107 = ssub.s32 %s16, %s28
    %s108 = ssub.s32 %s17, %s24
    %s109 = sor.u32 %s107, %s108
    %p110 = scmp.eq.s32.totalorder %s109, 0
    %s112 = sadd.s32 %s111, 1
    %s113 = scalar_select %p110, %s111, %s112
    %p116 = pneg %p110
    %p117 = scmp.eq.s32.totalorder %s9, 1
    %p118 = por %p116, %p117
    %p119 = scmp.ne.s32.totalorder %s111, %s114
    %p120 = scmp.eq.s32.totalorder %s9, 0
    %p121 = por %p119, %p120
    %p122 = scmp.ne.s32.totalorder %s111, %s114
    %p123 = scmp.eq.s32.totalorder %s14, 1
    %p124 = por %p122, %p123
    %p125 = scmp.ne.s32.totalorder %s114, %s115
    %p126 = scmp.eq.s32.totalorder %s14, 0
    %p127 = por %p125, %p126
    %p128 = scmp.ne.s32.totalorder %s114, %s115
    %p129 = scmp.eq.s32.totalorder %s15, 1
    %p130 = por %p128, %p129
    %p132 = scmp.ne.s32.totalorder %s115, %s131
    %p133 = scmp.eq.s32.totalorder %s15, 0
    %p134 = por %p132, %p133
    %p135 = scmp.le.s32.totalorder 1, %s9
    %p136 = scmp.lt.s32.totalorder %s9, 3
    %p137 = pnand %p135, %p136
    %p138 = pneg %p137
    // Predicated region
    $region9: #{_stem_apply.1} parent=5 // pred_check
      _
    $region10: #{_stem_apply.1} parent=5 // pred_check_branch
      %140 = sbr.rel (%p137) target = $region12
    $region11: #{_stem_apply.1} parent=5 // pred_region
      %s141 = ssub.s32 %s9, 1
      // Predicated region
      $region13: #{_stem_apply.1} parent=11 // pred_check
        %p142 = pneg %p73
      $region14: #{_stem_apply.1} parent=11 // pred_check_branch
        %144 = sbr.rel (%p142) target = $region16
      $region15: #{_stem_apply.1} parent=11 // pred_region
        %p145 = scmp.lt.s32.totalorder %s19, 0
        %s146 = scalar_select %p145, %s19, 0
        %s147 = smul.addr %s146, 4
        %s148 = scalar_lea.vmem %s1, %s147
      $region16: #{_stem_apply.1} parent=11 // pred_fallthru
        _
      // Predicated region
      $region17: #{_stem_apply.1} parent=11 // pred_check
        %p149 = pneg %p99
      $region18: #{_stem_apply.1} parent=11 // pred_check_branch
        %151 = sbr.rel (%p149) target = $region20
      $region19: #{_stem_apply.1} parent=11 // pred_region
        %p152 = scmp.lt.s32.totalorder %s19, 0
        %s153 = scalar_select %p152, %s19, 0
        %s154 = scalar_lea.vmem %s2, %s153
      $region20: #{_stem_apply.1} parent=11 // pred_fallthru
        _
    $region12: #{_stem_apply.1} parent=5 // pred_fallthru
      _
    %p155 = scmp.lt.s32.totalorder %s9, 2
    // Predicated region
    $region21: #{_stem_apply.1} parent=5 // pred_check
      %p156 = pneg %p155
    $region22: #{_stem_apply.1} parent=5 // pred_check_branch
      %158 = sbr.rel (%p156) target = $region24
    $region23: #{_stem_apply.1} parent=5 // pred_region
      // Predicated region
      $region25: #{_stem_apply.1} parent=23 // pred_check
        %p159 = pneg %p41
      $region26: #{_stem_apply.1} parent=23 // pred_check_branch
        %161 = sbr.rel (%p159) target = $region28
      $region27: #{_stem_apply.1} parent=23 // pred_region
        %s162 = smul.u32 32, %s16
        %p163 = scmp.lt.s32.totalorder %s162, 63
        %s164 = scalar_select %p163, %s162, 63
        %s165 = smul.addr %s164, 2
        %s166 = smul.addr %s165, 4
        %s167 = scalar_lea.vmem %s0, %s166
        %s168 = smul.u32 32, %s16
      $region28: #{_stem_apply.1} parent=23 // pred_fallthru
        _
    $region24: #{_stem_apply.1} parent=5 // pred_fallthru
      _
    %p169 = scmp.le.s32.totalorder 1, %s9
    %p170 = scmp.lt.s32.totalorder %s9, 3
    %p171 = pnand %p169, %p170
    %p172 = pneg %p171
    // Predicated region
    $region29: #{_stem_apply.1} parent=5 // pred_check
      _
    $region30: #{_stem_apply.1} parent=5 // pred_check_branch
      %174 = sbr.rel (%p171) target = $region32
    $region31: #{_stem_apply.1} parent=5 // pred_region
      %s175 = ssub.s32 %s9, 1
      %s176 = smul.u32 32, %s18
      %p177 = scmp.lt.s32.totalorder %s176, 63
      %s178 = scalar_select %p177, %s176, 63
      %s179 = smul.addr %s178, 2
      %s180 = smul.addr %s179, 4
      %s181 = scalar_lea.vmem %s0, %s180
      %p182 = pneg %p47
      %p183 = pneg %p44
      %p184 = scmp.lt.s32.totalorder %s19, 0
      %s185 = scalar_select %p184, %s19, 0
      %s186 = smul.addr %s185, 4
      %s187 = scalar_lea.vmem %s1, %s186
      %p188 = pneg %p73
      %p189 = pneg %p70
      %p190 = scmp.lt.s32.totalorder %s19, 0
      %s191 = scalar_select %p190, %s19, 0
      %s192 = scalar_lea.vmem %s2, %s191
      %p193 = pneg %p99
      %p194 = pneg %p96
      %p195 = pneg %p127
      %p196 = pneg %p124
      %s197 = smul.u32 32, %s18
      %p198 = scmp.lt.s32.totalorder %s197, 63
      %s199 = scalar_select %p198, %s197, 63
      %p200 = scmp.lt.s32.totalorder %s19, 0
      %s201 = scalar_select %p200, %s19, 0
      %s202 = sadd.s32 %s201, %s199
      %s203 = smul.addr %s202, 4
      %s204 = scalar_lea.vmem %s3, %s203
      %s205 = smul.u32 32, %s18
      %p206 = scmp.lt.s32.totalorder %s205, 63
      %s207 = scalar_select %p206, %s205, 63
      %s208 = smul.addr %s207, 2
      %s209 = smul.addr %s208, 4
      %s210 = scalar_lea.vmem %s0, %s209
      %s211 = smul.u32 32, %s18
      %p212 = scmp.lt.s32.totalorder %s19, 0
      %s213 = scalar_select %p212, %s19, 0
      %s214 = smul.addr %s213, 4
      %s215 = scalar_lea.vmem %s1, %s214
      %p216 = scmp.lt.s32.totalorder %s19, 0
      %s217 = scalar_select %p216, %s19, 0
      %s218 = scalar_lea.vmem %s2, %s217
      %s219 = smul.u32 32, %s18
      %p220 = scmp.lt.s32.totalorder %s219, 63
      %s221 = scalar_select %p220, %s219, 63
      %p222 = scmp.lt.s32.totalorder %s19, 0
      %s223 = scalar_select %p222, %s19, 0
      %s224 = sadd.s32 %s223, %s221
      %s225 = smul.addr %s224, 4
      %s226 = scalar_lea.vmem %s3, %s225
      %s227 = smul.u32 32, %s18
      %v229 = vld [vmem:[%s210] sm:$0xff]
      %v230 = vld [vmem:[%s210 + $0x8] sm:$0xff]
      %v231 = vld [vmem:[%s210 + $0x10] sm:$0xff]
      %v232 = vld [vmem:[%s210 + $0x18] sm:$0xff]
      %v233 = vld [vmem:[%s210 + $0x20] sm:$0xff]
      %v234 = vld [vmem:[%s210 + $0x28] sm:$0xff]
      %v235 = vld [vmem:[%s210 + $0x30] sm:$0xff]
      %v236 = vld [vmem:[%s210 + $0x38] sm:$0xff]
      %v237 = vld [vmem:[%s210 + $0x40] sm:$0xff]
      %v238 = vld [vmem:[%s210 + $0x48] sm:$0xff]
      %v239 = vld [vmem:[%s210 + $0x50] sm:$0xff]
      %v240 = vld [vmem:[%s210 + $0x58] sm:$0xff]
      %v241 = vld [vmem:[%s210 + $0x60] sm:$0xff]
      %v242 = vld [vmem:[%s210 + $0x68] sm:$0xff]
      %v243 = vld [vmem:[%s210 + $0x70] sm:$0xff]
      %v244 = vld [vmem:[%s210 + $0x78] sm:$0xff]
      %v245 = vld [vmem:[%s210 + $0x80] sm:$0xff]
      %v246 = vld [vmem:[%s210 + $0x88] sm:$0xff]
      %v247 = vld [vmem:[%s210 + $0x90] sm:$0xff]
      %v248 = vld [vmem:[%s210 + $0x98] sm:$0xff]
      %v249 = vld [vmem:[%s210 + $0xa0] sm:$0xff]
      %v250 = vld [vmem:[%s210 + $0xa8] sm:$0xff]
      %v251 = vld [vmem:[%s210 + $0xb0] sm:$0xff]
      %v252 = vld [vmem:[%s210 + $0xb8] sm:$0xff]
      %v253 = vld [vmem:[%s210 + $0xc0] sm:$0xff]
      %v254 = vld [vmem:[%s210 + $0xc8] sm:$0xff]
      %v255 = vld [vmem:[%s210 + $0xd0] sm:$0xff]
      %v256 = vld [vmem:[%s210 + $0xd8] sm:$0xff]
      %v257 = vld [vmem:[%s210 + $0xe0] sm:$0xff]
      %v258 = vld [vmem:[%s210 + $0xe8] sm:$0xff]
      %v259 = vld [vmem:[%s210 + $0xf0] sm:$0xff]
      %v260 = vld [vmem:[%s210 + $0xf8] sm:$0xff]
      %v261 = vld [vmem:[%s215] sm:$0xf]
      %v262 = vld [vmem:[%s215 + $0x4] sm:$0xf]
      %v263 = vld [vmem:[%s215 + $0x8] sm:$0xf]
      %v264 = vld [vmem:[%s215 + $0xc] sm:$0xf]
      %v265 = vld [vmem:[%s215 + $0x10] sm:$0xf]
      %v266 = vld [vmem:[%s215 + $0x14] sm:$0xf]
      %v267 = vld [vmem:[%s215 + $0x18] sm:$0xf]
      %v268 = vld [vmem:[%s215 + $0x1c] sm:$0xf]
      %v269 = vld [vmem:[%s215 + $0x20] sm:$0xf]
      %v270 = vld [vmem:[%s215 + $0x24] sm:$0xf]
      %v271 = vld [vmem:[%s215 + $0x28] sm:$0xf]
      %v272 = vld [vmem:[%s215 + $0x2c] sm:$0xf]
      %v273 = vld [vmem:[%s215 + $0x30] sm:$0xf]
      %v274 = vld [vmem:[%s215 + $0x34] sm:$0xf]
      %v275 = vld [vmem:[%s215 + $0x38] sm:$0xf]
      %v276 = vld [vmem:[%s215 + $0x3c] sm:$0xf]
      %v277 = vld [vmem:[%s215 + $0x40] sm:$0xf]
      %v278 = vld [vmem:[%s215 + $0x44] sm:$0xf]
      %v279 = vld [vmem:[%s215 + $0x48] sm:$0xf]
      %v280 = vld [vmem:[%s215 + $0x4c] sm:$0xf]
      %v281 = vld [vmem:[%s215 + $0x50] sm:$0xf]
      %v282 = vld [vmem:[%s215 + $0x54] sm:$0xf]
      %v283 = vld [vmem:[%s215 + $0x58] sm:$0xf]
      %v284 = vld [vmem:[%s215 + $0x5c] sm:$0xf]
      %v285 = vld [vmem:[%s215 + $0x60] sm:$0xf]
      %v286 = vld [vmem:[%s215 + $0x64] sm:$0xf]
      %v287 = vld [vmem:[%s215 + $0x68] sm:$0xf]
      %v288 = vld [vmem:[%s215 + $0x6c] sm:$0xf]
      %v289 = vld [vmem:[%s215 + $0x70] sm:$0xf]
      %v290 = vld [vmem:[%s215 + $0x74] sm:$0xf]
      %v291 = vld [vmem:[%s215 + $0x78] sm:$0xf]
      %v292 = vld [vmem:[%s215 + $0x7c] sm:$0xf]
      %v293 = vld [vmem:[%s218] sm:$0x1]
      %v295 = vlaneseq
      %v296 = vshrl.u32 %v295, 7
      %v297 = vsub.s32 0, %v296
      %v298 = vrot.slane %v293, %v297
      %v332 = vunpack.c.l.b16 %v229
      %v333 = vunpack.c.h.b16 %v229
      %v334 = vunpack.c.l.b16 %v230
      %v335 = vunpack.c.h.b16 %v230
      %v336 = vunpack.c.l.b16 %v231
      %v337 = vunpack.c.h.b16 %v231
      %v338 = vunpack.c.l.b16 %v232
      %v339 = vunpack.c.h.b16 %v232
      %v340 = vunpack.c.l.b16 %v233
      %v341 = vunpack.c.h.b16 %v233
      %v342 = vunpack.c.l.b16 %v234
      %v343 = vunpack.c.h.b16 %v234
      %v344 = vunpack.c.l.b16 %v235
      %v345 = vunpack.c.h.b16 %v235
      %v346 = vunpack.c.l.b16 %v236
      %v347 = vunpack.c.h.b16 %v236
      %v348 = vunpack.c.l.b16 %v237
      %v349 = vunpack.c.h.b16 %v237
      %v350 = vunpack.c.l.b16 %v238
      %v351 = vunpack.c.h.b16 %v238
      %v352 = vunpack.c.l.b16 %v239
      %v353 = vunpack.c.h.b16 %v239
      %v354 = vunpack.c.l.b16 %v240
      %v355 = vunpack.c.h.b16 %v240
      %v356 = vunpack.c.l.b16 %v241
      %v357 = vunpack.c.h.b16 %v241
      %v358 = vunpack.c.l.b16 %v242
      %v359 = vunpack.c.h.b16 %v242
      %v360 = vunpack.c.l.b16 %v243
      %v361 = vunpack.c.h.b16 %v243
      %v362 = vunpack.c.l.b16 %v244
      %v363 = vunpack.c.h.b16 %v244
      %v364 = vunpack.c.l.b16 %v245
      %v365 = vunpack.c.h.b16 %v245
      %v366 = vunpack.c.l.b16 %v246
      %v367 = vunpack.c.h.b16 %v246
      %v368 = vunpack.c.l.b16 %v247
      %v369 = vunpack.c.h.b16 %v247
      %v370 = vunpack.c.l.b16 %v248
      %v371 = vunpack.c.h.b16 %v248
      %v372 = vunpack.c.l.b16 %v249
      %v373 = vunpack.c.h.b16 %v249
      %v374 = vunpack.c.l.b16 %v250
      %v375 = vunpack.c.h.b16 %v250
      %v376 = vunpack.c.l.b16 %v251
      %v377 = vunpack.c.h.b16 %v251
      %v378 = vunpack.c.l.b16 %v252
      %v379 = vunpack.c.h.b16 %v252
      %v380 = vunpack.c.l.b16 %v253
      %v381 = vunpack.c.h.b16 %v253
      %v382 = vunpack.c.l.b16 %v254
      %v383 = vunpack.c.h.b16 %v254
      %v384 = vunpack.c.l.b16 %v255
      %v385 = vunpack.c.h.b16 %v255
      %v386 = vunpack.c.l.b16 %v256
      %v387 = vunpack.c.h.b16 %v256
      %v388 = vunpack.c.l.b16 %v257
      %v389 = vunpack.c.h.b16 %v257
      %v390 = vunpack.c.l.b16 %v258
      %v391 = vunpack.c.h.b16 %v258
      %v392 = vunpack.c.l.b16 %v259
      %v393 = vunpack.c.h.b16 %v259
      %v394 = vunpack.c.l.b16 %v260
      %v395 = vunpack.c.h.b16 %v260
      %v396 = vpack.c.b16 %v334, %v332
      %v397 = vpack.c.b16 %v335, %v333
      %v398 = vpack.c.b16 %v338, %v336
      %v399 = vpack.c.b16 %v339, %v337
      %v400 = vpack.c.b16 %v342, %v340
      %v401 = vpack.c.b16 %v343, %v341
      %v402 = vpack.c.b16 %v346, %v344
      %v403 = vpack.c.b16 %v347, %v345
      %v404 = vpack.c.b16 %v350, %v348
      %v405 = vpack.c.b16 %v351, %v349
      %v406 = vpack.c.b16 %v354, %v352
      %v407 = vpack.c.b16 %v355, %v353
      %v408 = vpack.c.b16 %v358, %v356
      %v409 = vpack.c.b16 %v359, %v357
      %v410 = vpack.c.b16 %v362, %v360
      %v411 = vpack.c.b16 %v363, %v361
      %v412 = vpack.c.b16 %v366, %v364
      %v413 = vpack.c.b16 %v367, %v365
      %v414 = vpack.c.b16 %v370, %v368
      %v415 = vpack.c.b16 %v371, %v369
      %v416 = vpack.c.b16 %v374, %v372
      %v417 = vpack.c.b16 %v375, %v373
      %v418 = vpack.c.b16 %v378, %v376
      %v419 = vpack.c.b16 %v379, %v377
      %v420 = vpack.c.b16 %v382, %v380
      %v421 = vpack.c.b16 %v383, %v381
      %v422 = vpack.c.b16 %v386, %v384
      %v423 = vpack.c.b16 %v387, %v385
      %v424 = vpack.c.b16 %v390, %v388
      %v425 = vpack.c.b16 %v391, %v389
      %v426 = vpack.c.b16 %v394, %v392
      %v427 = vpack.c.b16 %v395, %v393
      %v492 = vunpack.c.l.b16 %v261
      %v493 = vunpack.c.l.b16 %v262
      %v494 = vunpack.c.l.b16 %v263
      %v495 = vunpack.c.l.b16 %v264
      %v496 = vunpack.c.l.b16 %v265
      %v497 = vunpack.c.l.b16 %v266
      %v498 = vunpack.c.l.b16 %v267
      %v499 = vunpack.c.l.b16 %v268
      %v500 = vunpack.c.l.b16 %v269
      %v501 = vunpack.c.l.b16 %v270
      %v502 = vunpack.c.l.b16 %v271
      %v503 = vunpack.c.l.b16 %v272
      %v504 = vunpack.c.l.b16 %v273
      %v505 = vunpack.c.l.b16 %v274
      %v506 = vunpack.c.l.b16 %v275
      %v507 = vunpack.c.l.b16 %v276
      %v508 = vunpack.c.l.b16 %v277
      %v509 = vunpack.c.l.b16 %v278
      %v510 = vunpack.c.l.b16 %v279
      %v511 = vunpack.c.l.b16 %v280
      %v512 = vunpack.c.l.b16 %v281
      %v513 = vunpack.c.l.b16 %v282
      %v514 = vunpack.c.l.b16 %v283
      %v515 = vunpack.c.l.b16 %v284
      %v516 = vunpack.c.l.b16 %v285
      %v517 = vunpack.c.l.b16 %v286
      %v518 = vunpack.c.l.b16 %v287
      %v519 = vunpack.c.l.b16 %v288
      %v520 = vunpack.c.l.b16 %v289
      %v521 = vunpack.c.l.b16 %v290
      %v522 = vunpack.c.l.b16 %v291
      %v523 = vunpack.c.l.b16 %v292
      %v524 = vpack.c.b16 %v493, %v492
      %v525 = vpack.c.b16 %v495, %v494
      %v526 = vpack.c.b16 %v497, %v496
      %v527 = vpack.c.b16 %v499, %v498
      %v528 = vpack.c.b16 %v501, %v500
      %v529 = vpack.c.b16 %v503, %v502
      %v530 = vpack.c.b16 %v505, %v504
      %v531 = vpack.c.b16 %v507, %v506
      %v532 = vpack.c.b16 %v509, %v508
      %v533 = vpack.c.b16 %v511, %v510
      %v534 = vpack.c.b16 %v513, %v512
      %v535 = vpack.c.b16 %v515, %v514
      %v536 = vpack.c.b16 %v517, %v516
      %v537 = vpack.c.b16 %v519, %v518
      %v538 = vpack.c.b16 %v521, %v520
      %v539 = vpack.c.b16 %v523, %v522
      %556 = vmatprep.subr.bf16.mxu0 0
      %557 = vmatpush1.bf16.msra.mxu0 %v524
      %558 = vmatprep.subr.bf16.mxu0 0
      %559 = vmatpush1.bf16.msra.mxu0 %v525
      %560 = vmatprep.subr.bf16.mxu0 0
      %561 = vmatpush1.bf16.msra.mxu0 %v526
      %562 = vmatprep.subr.bf16.mxu0 0
      %563 = vmatpush1.bf16.msra.mxu0 %v527
      %564 = vmatprep.subr.bf16.mxu0 0
      %565 = vmatpush1.bf16.msra.mxu0 %v528
      %566 = vmatprep.subr.bf16.mxu0 0
      %567 = vmatpush1.bf16.msra.mxu0 %v529
      %568 = vmatprep.subr.bf16.mxu0 0
      %569 = vmatpush1.bf16.msra.mxu0 %v530
      %570 = vmatprep.subr.bf16.mxu0 0
      %571 = vmatpush1.bf16.msra.mxu0 %v531
      %572 = vmatprep.subr.bf16.mxu0 0
      %573 = vmatpush1.bf16.msra.mxu0 %v532
      %574 = vmatprep.subr.bf16.mxu0 0
      %575 = vmatpush1.bf16.msra.mxu0 %v533
      %576 = vmatprep.subr.bf16.mxu0 0
      %577 = vmatpush1.bf16.msra.mxu0 %v534
      %578 = vmatprep.subr.bf16.mxu0 0
      %579 = vmatpush1.bf16.msra.mxu0 %v535
      %580 = vmatprep.subr.bf16.mxu0 0
      %581 = vmatpush1.bf16.msra.mxu0 %v536
      %582 = vmatprep.subr.bf16.mxu0 0
      %583 = vmatpush1.bf16.msra.mxu0 %v537
      %584 = vmatprep.subr.bf16.mxu0 0
      %585 = vmatpush1.bf16.msra.mxu0 %v538
      %586 = vmatprep.subr.bf16.mxu0 0
      %587 = vmatpush1.bf16.msra.mxu0 %v539
      %588 = vmatprep.mubr.bf16.mxu0 %v397
      %589 = vmatmul.mubr.bf16.gmra.mrb[0].mxu0 %v396
      %v590 = vpop.f32.mrb[0].mxu0
      %v591 = vadd.f32 %v298, %v590
      %v592 = vpop.f32.mrb[0].mxu0
      %v593 = vpop.f32.mrb[0].mxu0
      %v594 = vadd.f32 %v298, %v593
      %v595 = vpop.f32.mrb[0].mxu0
      %596 = vmatprep.mubr.bf16.mxu0 %v399
      %597 = vmatmul.mubr.bf16.gmra.mrb[0].mxu0 %v398
      %v598 = vpop.f32.mrb[0].mxu0
      %v599 = vadd.f32 %v298, %v598
      %v600 = vpop.f32.mrb[0].mxu0
      %v601 = vpop.f32.mrb[0].mxu0
      %v602 = vadd.f32 %v298, %v601
      %v603 = vpop.f32.mrb[0].mxu0
      %604 = vmatprep.mubr.bf16.mxu0 %v401
      %605 = vmatmul.mubr.bf16.gmra.mrb[0].mxu0 %v400
      %v606 = vpop.f32.mrb[0].mxu0
      %v607 = vadd.f32 %v298, %v606
      %v608 = vpop.f32.mrb[0].mxu0
      %v609 = vpop.f32.mrb[0].mxu0
      %v610 = vadd.f32 %v298, %v609
      %v611 = vpop.f32.mrb[0].mxu0
      %612 = vmatprep.mubr.bf16.mxu0 %v403
      %613 = vmatmul.mubr.bf16.gmra.mrb[0].mxu0 %v402
      %v614 = vpop.f32.mrb[0].mxu0
      %v615 = vadd.f32 %v298, %v614
      %v616 = vpop.f32.mrb[0].mxu0
      %v617 = vpop.f32.mrb[0].mxu0
      %v618 = vadd.f32 %v298, %v617
      %v619 = vpop.f32.mrb[0].mxu0
      %620 = vmatprep.mubr.bf16.mxu0 %v405
      %621 = vmatmul.mubr.bf16.gmra.mrb[0].mxu0 %v404
      %v622 = vpop.f32.mrb[0].mxu0
      %v623 = vadd.f32 %v298, %v622
      %v624 = vpop.f32.mrb[0].mxu0
      %v625 = vpop.f32.mrb[0].mxu0
      %v626 = vadd.f32 %v298, %v625
      %v627 = vpop.f32.mrb[0].mxu0
      %628 = vmatprep.mubr.bf16.mxu0 %v407
      %629 = vmatmul.mubr.bf16.gmra.mrb[0].mxu0 %v406
      %v630 = vpop.f32.mrb[0].mxu0
      %v631 = vadd.f32 %v298, %v630
      %v632 = vpop.f32.mrb[0].mxu0
      %v633 = vpop.f32.mrb[0].mxu0
      %v634 = vadd.f32 %v298, %v633
      %v635 = vpop.f32.mrb[0].mxu0
      %636 = vmatprep.mubr.bf16.mxu0 %v409
      %637 = vmatmul.mubr.bf16.gmra.mrb[0].mxu0 %v408
      %v638 = vpop.f32.mrb[0].mxu0
      %v639 = vadd.f32 %v298, %v638
      %v640 = vpop.f32.mrb[0].mxu0
      %v641 = vpop.f32.mrb[0].mxu0
      %v642 = vadd.f32 %v298, %v641
      %v643 = vpop.f32.mrb[0].mxu0
      %644 = vmatprep.mubr.bf16.mxu0 %v411
      %645 = vmatmul.mubr.bf16.gmra.mrb[0].mxu0 %v410
      %v646 = vpop.f32.mrb[0].mxu0
      %v647 = vadd.f32 %v298, %v646
      %v648 = vpop.f32.mrb[0].mxu0
      %v649 = vpop.f32.mrb[0].mxu0
      %v650 = vadd.f32 %v298, %v649
      %v651 = vpop.f32.mrb[0].mxu0
      %652 = vmatprep.mubr.bf16.mxu0 %v413
      %653 = vmatmul.mubr.bf16.gmra.mrb[0].mxu0 %v412
      %v654 = vpop.f32.mrb[0].mxu0
      %v655 = vadd.f32 %v298, %v654
      %v656 = vpop.f32.mrb[0].mxu0
      %v657 = vpop.f32.mrb[0].mxu0
      %v658 = vadd.f32 %v298, %v657
      %v659 = vpop.f32.mrb[0].mxu0
      %660 = vmatprep.mubr.bf16.mxu0 %v415
      %661 = vmatmul.mubr.bf16.gmra.mrb[0].mxu0 %v414
      %v662 = vpop.f32.mrb[0].mxu0
      %v663 = vadd.f32 %v298, %v662
      %v664 = vpop.f32.mrb[0].mxu0
      %v665 = vpop.f32.mrb[0].mxu0
      %v666 = vadd.f32 %v298, %v665
      %v667 = vpop.f32.mrb[0].mxu0
      %668 = vmatprep.mubr.bf16.mxu0 %v417
      %669 = vmatmul.mubr.bf16.gmra.mrb[0].mxu0 %v416
      %v670 = vpop.f32.mrb[0].mxu0
      %v671 = vadd.f32 %v298, %v670
      %v672 = vpop.f32.mrb[0].mxu0
      %v673 = vpop.f32.mrb[0].mxu0
      %v674 = vadd.f32 %v298, %v673
      %v675 = vpop.f32.mrb[0].mxu0
      %676 = vmatprep.mubr.bf16.mxu0 %v419
      %677 = vmatmul.mubr.bf16.gmra.mrb[0].mxu0 %v418
      %v678 = vpop.f32.mrb[0].mxu0
      %v679 = vadd.f32 %v298, %v678
      %v680 = vpop.f32.mrb[0].mxu0
      %v681 = vpop.f32.mrb[0].mxu0
      %v682 = vadd.f32 %v298, %v681
      %v683 = vpop.f32.mrb[0].mxu0
      %684 = vmatprep.mubr.bf16.mxu0 %v421
      %685 = vmatmul.mubr.bf16.gmra.mrb[0].mxu0 %v420
      %v686 = vpop.f32.mrb[0].mxu0
      %v687 = vadd.f32 %v298, %v686
      %v688 = vpop.f32.mrb[0].mxu0
      %v689 = vpop.f32.mrb[0].mxu0
      %v690 = vadd.f32 %v298, %v689
      %v691 = vpop.f32.mrb[0].mxu0
      %692 = vmatprep.mubr.bf16.mxu0 %v423
      %693 = vmatmul.mubr.bf16.gmra.mrb[0].mxu0 %v422
      %v694 = vpop.f32.mrb[0].mxu0
      %v695 = vadd.f32 %v298, %v694
      %v696 = vpop.f32.mrb[0].mxu0
      %v697 = vpop.f32.mrb[0].mxu0
      %v698 = vadd.f32 %v298, %v697
      %v699 = vpop.f32.mrb[0].mxu0
      %700 = vmatprep.mubr.bf16.mxu0 %v425
      %701 = vmatmul.mubr.bf16.gmra.mrb[0].mxu0 %v424
      %v702 = vpop.f32.mrb[0].mxu0
      %v703 = vadd.f32 %v298, %v702
      %v704 = vpop.f32.mrb[0].mxu0
      %v705 = vpop.f32.mrb[0].mxu0
      %v706 = vadd.f32 %v298, %v705
      %v707 = vpop.f32.mrb[0].mxu0
      %708 = vmatprep.mubr.bf16.mxu0 %v427
      %709 = vmatmul.mubr.bf16.gmra.mrb[0].mxu0 %v426
      %v710 = vpop.f32.mrb[0].mxu0
      %v711 = vadd.f32 %v298, %v710
      %v712 = vpop.f32.mrb[0].mxu0
      %v713 = vpop.f32.mrb[0].mxu0
      %v714 = vadd.f32 %v298, %v713
      %v715 = vpop.f32.mrb[0].mxu0
      %716 = vdwg.mxu0
      %v717 = vmax.f32 %v591, 0.0
      %v718 = vmax.f32 %v594, 0.0
      %v719 = vmax.f32 %v599, 0.0
      %v720 = vmax.f32 %v602, 0.0
      %v721 = vmax.f32 %v607, 0.0
      %v722 = vmax.f32 %v610, 0.0
      %v723 = vmax.f32 %v615, 0.0
      %v724 = vmax.f32 %v618, 0.0
      %v725 = vmax.f32 %v623, 0.0
      %v726 = vmax.f32 %v626, 0.0
      %v727 = vmax.f32 %v631, 0.0
      %v728 = vmax.f32 %v634, 0.0
      %v729 = vmax.f32 %v639, 0.0
      %v730 = vmax.f32 %v642, 0.0
      %v731 = vmax.f32 %v647, 0.0
      %v732 = vmax.f32 %v650, 0.0
      %v733 = vmax.f32 %v655, 0.0
      %v734 = vmax.f32 %v658, 0.0
      %v735 = vmax.f32 %v663, 0.0
      %v736 = vmax.f32 %v666, 0.0
      %v737 = vmax.f32 %v671, 0.0
      %v738 = vmax.f32 %v674, 0.0
      %v739 = vmax.f32 %v679, 0.0
      %v740 = vmax.f32 %v682, 0.0
      %v741 = vmax.f32 %v687, 0.0
      %v742 = vmax.f32 %v690, 0.0
      %v743 = vmax.f32 %v695, 0.0
      %v744 = vmax.f32 %v698, 0.0
      %v745 = vmax.f32 %v703, 0.0
      %v746 = vmax.f32 %v706, 0.0
      %v747 = vmax.f32 %v711, 0.0
      %v748 = vmax.f32 %v714, 0.0
      %v749 = vpack.c.bf16 %v718, %v717
      %v750 = vpack.c.bf16 %v720, %v719
      %v751 = vpack.c.bf16 %v722, %v721
      %v752 = vpack.c.bf16 %v724, %v723
      %v753 = vpack.c.bf16 %v726, %v725
      %v754 = vpack.c.bf16 %v728, %v727
      %v755 = vpack.c.bf16 %v730, %v729
      %v756 = vpack.c.bf16 %v732, %v731
      %v757 = vpack.c.bf16 %v734, %v733
      %v758 = vpack.c.bf16 %v736, %v735
      %v759 = vpack.c.bf16 %v738, %v737
      %v760 = vpack.c.bf16 %v740, %v739
      %v761 = vpack.c.bf16 %v742, %v741
      %v762 = vpack.c.bf16 %v744, %v743
      %v763 = vpack.c.bf16 %v746, %v745
      %v764 = vpack.c.bf16 %v748, %v747
      %v781 = vunpack.c.l.b16 %v749
      %v782 = vunpack.c.h.b16 %v749
      %v783 = vunpack.c.l.b16 %v750
      %v784 = vunpack.c.h.b16 %v750
      %v785 = vunpack.c.l.b16 %v751
      %v786 = vunpack.c.h.b16 %v751
      %v787 = vunpack.c.l.b16 %v752
      %v788 = vunpack.c.h.b16 %v752
      %v789 = vunpack.c.l.b16 %v753
      %v790 = vunpack.c.h.b16 %v753
      %v791 = vunpack.c.l.b16 %v754
      %v792 = vunpack.c.h.b16 %v754
      %v793 = vunpack.c.l.b16 %v755
      %v794 = vunpack.c.h.b16 %v755
      %v795 = vunpack.c.l.b16 %v756
      %v796 = vunpack.c.h.b16 %v756
      %v797 = vunpack.c.l.b16 %v757
      %v798 = vunpack.c.h.b16 %v757
      %v799 = vunpack.c.l.b16 %v758
      %v800 = vunpack.c.h.b16 %v758
      %v801 = vunpack.c.l.b16 %v759
      %v802 = vunpack.c.h.b16 %v759
      %v803 = vunpack.c.l.b16 %v760
      %v804 = vunpack.c.h.b16 %v760
      %v805 = vunpack.c.l.b16 %v761
      %v806 = vunpack.c.h.b16 %v761
      %v807 = vunpack.c.l.b16 %v762
      %v808 = vunpack.c.h.b16 %v762
      %v809 = vunpack.c.l.b16 %v763
      %v810 = vunpack.c.h.b16 %v763
      %v811 = vunpack.c.l.b16 %v764
      %v812 = vunpack.c.h.b16 %v764
      %v813 = vpack.c.b16 %v781, %v781
      %v814 = vpack.c.b16 %v782, %v782
      %v815 = vpack.c.b16 %v783, %v783
      %v816 = vpack.c.b16 %v784, %v784
      %v817 = vpack.c.b16 %v785, %v785
      %v818 = vpack.c.b16 %v786, %v786
      %v819 = vpack.c.b16 %v787, %v787
      %v820 = vpack.c.b16 %v788, %v788
      %v821 = vpack.c.b16 %v789, %v789
      %v822 = vpack.c.b16 %v790, %v790
      %v823 = vpack.c.b16 %v791, %v791
      %v824 = vpack.c.b16 %v792, %v792
      %v825 = vpack.c.b16 %v793, %v793
      %v826 = vpack.c.b16 %v794, %v794
      %v827 = vpack.c.b16 %v795, %v795
      %v828 = vpack.c.b16 %v796, %v796
      %v829 = vpack.c.b16 %v797, %v797
      %v830 = vpack.c.b16 %v798, %v798
      %v831 = vpack.c.b16 %v799, %v799
      %v832 = vpack.c.b16 %v800, %v800
      %v833 = vpack.c.b16 %v801, %v801
      %v834 = vpack.c.b16 %v802, %v802
      %v835 = vpack.c.b16 %v803, %v803
      %v836 = vpack.c.b16 %v804, %v804
      %v837 = vpack.c.b16 %v805, %v805
      %v838 = vpack.c.b16 %v806, %v806
      %v839 = vpack.c.b16 %v807, %v807
      %v840 = vpack.c.b16 %v808, %v808
      %v841 = vpack.c.b16 %v809, %v809
      %v842 = vpack.c.b16 %v810, %v810
      %v843 = vpack.c.b16 %v811, %v811
      %v844 = vpack.c.b16 %v812, %v812
      %877 = vst [vmem:[%s226] sm:$0xf] %v813
      %878 = vst [vmem:[%s226 + $0x4] sm:$0xf] %v814
      %879 = vst [vmem:[%s226 + $0x8] sm:$0xf] %v815
      %880 = vst [vmem:[%s226 + $0xc] sm:$0xf] %v816
      %881 = vst [vmem:[%s226 + $0x10] sm:$0xf] %v817
      %882 = vst [vmem:[%s226 + $0x14] sm:$0xf] %v818
      %883 = vst [vmem:[%s226 + $0x18] sm:$0xf] %v819
      %884 = vst [vmem:[%s226 + $0x1c] sm:$0xf] %v820
      %885 = vst [vmem:[%s226 + $0x20] sm:$0xf] %v821
      %886 = vst [vmem:[%s226 + $0x24] sm:$0xf] %v822
      %887 = vst [vmem:[%s226 + $0x28] sm:$0xf] %v823
      %888 = vst [vmem:[%s226 + $0x2c] sm:$0xf] %v824
      %889 = vst [vmem:[%s226 + $0x30] sm:$0xf] %v825
      %890 = vst [vmem:[%s226 + $0x34] sm:$0xf] %v826
      %891 = vst [vmem:[%s226 + $0x38] sm:$0xf] %v827
      %892 = vst [vmem:[%s226 + $0x3c] sm:$0xf] %v828
      %893 = vst [vmem:[%s226 + $0x40] sm:$0xf] %v829
      %894 = vst [vmem:[%s226 + $0x44] sm:$0xf] %v830
      %895 = vst [vmem:[%s226 + $0x48] sm:$0xf] %v831
      %896 = vst [vmem:[%s226 + $0x4c] sm:$0xf] %v832
      %897 = vst [vmem:[%s226 + $0x50] sm:$0xf] %v833
      %898 = vst [vmem:[%s226 + $0x54] sm:$0xf] %v834
      %899 = vst [vmem:[%s226 + $0x58] sm:$0xf] %v835
      %900 = vst [vmem:[%s226 + $0x5c] sm:$0xf] %v836
      %901 = vst [vmem:[%s226 + $0x60] sm:$0xf] %v837
      %902 = vst [vmem:[%s226 + $0x64] sm:$0xf] %v838
      %903 = vst [vmem:[%s226 + $0x68] sm:$0xf] %v839
      %904 = vst [vmem:[%s226 + $0x6c] sm:$0xf] %v840
      %905 = vst [vmem:[%s226 + $0x70] sm:$0xf] %v841
      %906 = vst [vmem:[%s226 + $0x74] sm:$0xf] %v842
      %907 = vst [vmem:[%s226 + $0x78] sm:$0xf] %v843
      %908 = vst [vmem:[%s226 + $0x7c] sm:$0xf] %v844
      %s909 = smul.u32 32, %s18
      %p910 = scmp.lt.s32.totalorder %s909, 63
      %s911 = scalar_select %p910, %s909, 63
      %p912 = scmp.lt.s32.totalorder %s19, 0
      %s913 = scalar_select %p912, %s19, 0
      %s914 = sadd.s32 %s913, %s911
      %s915 = smul.addr %s914, 4
      %s916 = scalar_lea.vmem %s3, %s915
      // Predicated region
      $region33: #{_stem_apply.1} parent=31 // pred_check
        %p917 = pneg %p124
      $region34: #{_stem_apply.1} parent=31 // pred_check_branch
        %919 = sbr.rel (%p917) target = $region36
      $region35: #{_stem_apply.1} parent=31 // pred_region
        %s920 = smul.u32 32, %s18
      $region36: #{_stem_apply.1} parent=31 // pred_fallthru
        _
    $region32: #{_stem_apply.1} parent=5 // pred_fallthru
      _
    %p921 = scmp.le.s32.totalorder 2, %s9
    // Predicated region
    $region37: #{_stem_apply.1} parent=5 // pred_check
      %p922 = pneg %p921
    $region38: #{_stem_apply.1} parent=5 // pred_check_branch
      %924 = sbr.rel (%p922) target = $region40
    $region39: #{_stem_apply.1} parent=5 // pred_region
      %s925 = ssub.s32 %s9, 2
      // Predicated region
      $region41: #{_stem_apply.1} parent=39 // pred_check
        %p926 = pneg %p130
      $region42: #{_stem_apply.1} parent=39 // pred_check_branch
        %928 = sbr.rel (%p926) target = $region44
      $region43: #{_stem_apply.1} parent=39 // pred_region
        %s929 = smul.u32 32, %s20
        %p930 = scmp.lt.s32.totalorder %s929, 63
        %s931 = scalar_select %p930, %s929, 63
        %p932 = scmp.lt.s32.totalorder %s21, 0
        %s933 = scalar_select %p932, %s21, 0
        %s934 = sadd.s32 %s933, %s931
        %s935 = smul.addr %s934, 4
        %s936 = scalar_lea.vmem %s3, %s935
      $region44: #{_stem_apply.1} parent=39 // pred_fallthru
        _
    $region40: #{_stem_apply.1} parent=5 // pred_fallthru
      _
  $region6: #{_stem_apply.1} parent=0 // loop_footer
    %s13 = sadd.s32 1, %s9
  $region7: #{_stem_apply.1} parent=0 // loop_footer_branch
    %8 = sbr.rel target = $region3
  $region8: #{_stem_apply.1} parent=0 // loop_exit
    _

</llo_original>
